<compile_context>
chip_gen: v7x
topology: tpu7x:2x2x1
jax: 0.10.0
libtpu: 0.0.40
codegen_flags: <defaults>
</compile_context>

<pallas_src>
import jax
import jax.numpy as jnp
from jax.experimental import pallas as pl
from jax.experimental.pallas import tpu as pltpu


def _round_up(n, m):
    return ((n + m - 1) // m) * m


def _discriminator_kernel(x_ref, w1_ref, b1_ref, w2_ref, b2_ref, w3_ref, b3_ref,
                          o_ref):
    # x_ref:  (TB, D)    f32    streamed per grid step (cast to bf16 in-kernel)
    # w1_ref: (D, H1p)   bf16   resident   b1_ref: (1, H1p) f32
    # w2_ref: (H1p, H2p) bf16   resident   b2_ref: (1, H2p) f32
    # w3_ref: (1, H2p)   f32    final layer as a zero-padded row
    # b3_ref: (1, 1)     f32    SMEM scalar
    x = x_ref[...].astype(jnp.bfloat16)  # convert fused with the VMEM-resident tile

    # Layer 1: Linear (MXU bf16 in / f32 acc) + bias (f32), LeakyReLU in bf16
    # (the bf16 cast is needed for the layer-2 matmul anyway; padded lanes stay 0).
    h = jnp.dot(x, w1_ref[...], preferred_element_type=jnp.float32) + b1_ref[...]
    h = h.astype(jnp.bfloat16)
    h = jnp.maximum(h, h * 0.1)

    # Layer 2: Linear + LeakyReLU(0.1) (epilogue in f32 -> feeds the f32 reduce).
    h = jnp.dot(h, w2_ref[...], preferred_element_type=jnp.float32) + b2_ref[...]
    h = jnp.maximum(h, h * 0.1)

    # Layer 3: (32 -> 1).  A 1-output-lane matmul wastes a full MXU issue, so do
    # it as elementwise multiply + lane reduction (VPU + XLU); padded lanes of h
    # and w3 are exactly zero so they contribute nothing.
    logit = jnp.sum(h * w3_ref[...], axis=-1, keepdims=True) + b3_ref[0, 0]

    o_ref[...] = jax.nn.sigmoid(logit).astype(o_ref.dtype)


def _prepare_params(params):
    """Cast MXU weights to bf16 and zero-pad hidden dims to 128 lanes."""
    (w1, b1), (w2, b2), (w3, b3) = params
    D, H1 = w1.shape
    H2 = w2.shape[1]
    H1p = _round_up(H1, 128)
    H2p = _round_up(H2, 128)

    w1p = jnp.zeros((D, H1p), jnp.bfloat16).at[:, :H1].set(w1.astype(jnp.bfloat16))
    b1p = jnp.zeros((1, H1p), jnp.float32).at[:, :H1].set(b1.astype(jnp.float32))
    w2p = jnp.zeros((H1p, H2p), jnp.bfloat16).at[:H1, :H2].set(w2.astype(jnp.bfloat16))
    b2p = jnp.zeros((1, H2p), jnp.float32).at[:, :H2].set(b2.astype(jnp.float32))
    # Final layer kept in f32 as a (1, H2p) row for the in-kernel reduction.
    w3row = jnp.zeros((1, H2p), jnp.float32).at[:, :H2].set(w3.astype(jnp.float32).T)
    b3s = b3.reshape(1, 1).astype(jnp.float32)
    return w1p, b1p, w2p, b2p, w3row, b3s


def discriminator_forward(x_nchw, params, *, block_b=4096):
    """x_nchw: (B, C, H, W) float32.  params: list of (W_in_out, b_row) pairs.

    block_b: max batch rows per grid step.  Per-step working set at 4096 rows is
    ~4 MiB of x (double-buffered 8 MiB) + ~100 KiB resident weights, well inside
    every generation's VMEM budget; the tile is additionally shrunk so the grid
    has >= 2 steps (both v7x TensorCores get work).
    """
    B = x_nchw.shape[0]
    x = x_nchw.reshape(B, -1)  # fp32 stream; bf16 cast happens inside the kernel
    D = x.shape[1]

    w1p, b1p, w2p, b2p, w3row, b3s = _prepare_params(params)
    H1p = w1p.shape[1]
    H2p = w2p.shape[1]
    assert w1p.shape[0] == D

    # Batch tile: big (amortize ~0.35 us/step overhead), but at most half the
    # batch (rounded to 128 rows) so v7x's two TensorCores both get grid steps.
    TB = min(block_b, _round_up(pl.cdiv(B, 2), 128))
    TB = max(TB, 128)
    if TB >= B:
        TB = B  # single full-extent block (exempt from the 8-row divisibility rule)
    grid = (pl.cdiv(B, TB),)
    # No padding of x: the trailing partial block's out-of-bounds reads are
    # garbage rows that never mix with valid rows, and their writes are masked.

    cost = pl.CostEstimate(
        flops=2 * B * (D * H1p + H1p * H2p + H2p),
        transcendentals=B,  # one sigmoid per row
        bytes_accessed=(x.size * 4 + w1p.size * 2 + w2p.size * 2
                        + (b1p.size + b2p.size + w3row.size + b3s.size) * 4
                        + B * 4),
    )

    out = pl.pallas_call(
        _discriminator_kernel,
        out_shape=jax.ShapeDtypeStruct((B, 1), jnp.float32),
        grid=grid,
        in_specs=[
            pl.BlockSpec((TB, D), lambda i: (i, 0)),       # x: streamed per tile
            pl.BlockSpec((D, H1p), lambda i: (0, 0)),      # w1: VMEM-resident
            pl.BlockSpec((1, H1p), lambda i: (0, 0)),      # b1
            pl.BlockSpec((H1p, H2p), lambda i: (0, 0)),    # w2
            pl.BlockSpec((1, H2p), lambda i: (0, 0)),      # b2
            pl.BlockSpec((1, H2p), lambda i: (0, 0)),      # w3 row (f32)
            pl.BlockSpec(memory_space=pltpu.MemorySpace.SMEM),  # b3 scalar
        ],
        out_specs=pl.BlockSpec((TB, 1), lambda i: (i, 0)),
        compiler_params=pltpu.CompilerParams(
            dimension_semantics=("parallel",),
        ),
        cost_estimate=cost,
    )(x, w1p, b1p, w2p, b2p, w3row, b3s)

    return out


def init_params(key, input_dim, hidden_dim):
    """Deterministic PyTorch-style (uniform +/- 1/sqrt(fan_in)) init."""
    layer_in = [input_dim] + hidden_dim
    layer_out = hidden_dim + [1]
    params = []
    for in_dim, out_dim in zip(layer_in, layer_out):
        key, kw, kb = jax.random.split(key, 3)
        bound = 1.0 / (in_dim ** 0.5)
        w = jax.random.uniform(kw, (in_dim, out_dim), jnp.float32, -bound, bound)
        b = jax.random.uniform(kb, (1, out_dim), jnp.float32, -bound, bound)
        params.append((w, b))
    return params


def reference_forward(x_nchw, params):
    """Plain-JAX fp32 reference (same semantics as the PyTorch module)."""
    B = x_nchw.shape[0]
    h = x_nchw.reshape(B, -1)
    (w1, b1), (w2, b2), (w3, b3) = params
    h = h @ w1 + b1
    h = jnp.where(h > 0, h, 0.1 * h)
    h = h @ w2 + b2
    h = jnp.where(h > 0, h, 0.1 * h)
    h = h @ w3 + b3
    return jax.nn.sigmoid(h)


if __name__ == "__main__":
    key = jax.random.PRNGKey(0)

    # Shapes consistent with the module: image_size=(1, 16, 16), hidden=[64, 32].
    B = 200                      # deliberately NOT a multiple of the batch tile
    image_size = (1, 16, 16)
    hidden_dim = [64, 32]
    input_dim = image_size[0] * image_size[1] * image_size[2]

    key, kx = jax.random.split(key)
    x = jax.random.normal(kx, (B,) + image_size, jnp.float32)

    params = init_params(jax.random.PRNGKey(0), input_dim, hidden_dim)

    # TB becomes 128 here -> 2 grid steps (exercises the pipeline + ragged tail).
    out = discriminator_forward(x, params)
    out = jax.block_until_ready(out)

    ref = reference_forward(x, params)
    assert out.shape == (B, 1), out.shape
    # bf16 MXU inputs / bf16 layer-1 epilogue (fp32 accumulation) => small drift
    # vs the fp32 reference.
    err = float(jnp.max(jnp.abs(out - ref)))
    assert err < 3e-2, f"mismatch vs reference: max abs err {err}"

    print("KERNEL_OK")
</pallas_src>

<mosaic_0001>
module attributes {stable_mosaic.version = 11 : i64} {
  func.func @_discriminator_kernel(%arg0: i32, %arg1: memref<128x256xf32, #tpu.memory_space<vmem>>, %arg2: memref<256x128xbf16, #tpu.memory_space<vmem>>, %arg3: memref<1x128xf32, #tpu.memory_space<vmem>>, %arg4: memref<128x128xbf16, #tpu.memory_space<vmem>>, %arg5: memref<1x128xf32, #tpu.memory_space<vmem>>, %arg6: memref<1x128xf32, #tpu.memory_space<vmem>>, %arg7: memref<1x1xf32, #tpu.memory_space<smem>>, %arg8: memref<128x1xf32, #tpu.memory_space<vmem>>) attributes {dimension_semantics = [#tpu.dimension_semantics<parallel>], iteration_bounds = array<i64: 2>, scalar_prefetch = 0 : i64, scratch_operands = 0 : i64, tpu.core_type = #tpu.core_type<tc>, window_params = [{transform_indices = @transform_0, window_bounds = array<i64: 128, 256>}, {pipeline_mode = #tpu.pipeline_mode<synchronous>, transform_indices = @transform_1, window_bounds = array<i64: 256, 128>}, {pipeline_mode = #tpu.pipeline_mode<synchronous>, transform_indices = @transform_2, window_bounds = array<i64: 1, 128>}, {pipeline_mode = #tpu.pipeline_mode<synchronous>, transform_indices = @transform_3, window_bounds = array<i64: 128, 128>}, {pipeline_mode = #tpu.pipeline_mode<synchronous>, transform_indices = @transform_4, window_bounds = array<i64: 1, 128>}, {pipeline_mode = #tpu.pipeline_mode<synchronous>, transform_indices = @transform_5, window_bounds = array<i64: 1, 128>}, {transform_indices = @transform_6, window_bounds = array<i64: 1, 1>}, {transform_indices = @transform_7, window_bounds = array<i64: 128, 1>}]} {
    %c0 = arith.constant 0 : index
    %c0_0 = arith.constant 0 : index
    %0 = vector.load %arg1[%c0, %c0_0] : memref<128x256xf32, #tpu.memory_space<vmem>>, vector<128x256xf32>
    %1 = arith.truncf %0 : vector<128x256xf32> to vector<128x256xbf16>
    %c0_1 = arith.constant 0 : index
    %c0_2 = arith.constant 0 : index
    %2 = vector.load %arg2[%c0_1, %c0_2] : memref<256x128xbf16, #tpu.memory_space<vmem>>, vector<256x128xbf16>
    %cst = arith.constant dense<0.000000e+00> : vector<128x128xf32>
    %3 = tpu.matmul %1, %2, %cst {dimension_numbers = #tpu.dot_dimension_numbers<[1], [0], [0], [1], [0, 0, 1, 1], [], []>} : vector<128x256xbf16>, vector<256x128xbf16>, vector<128x128xf32> -> vector<128x128xf32>
    %c0_3 = arith.constant 0 : index
    %c0_4 = arith.constant 0 : index
    %4 = vector.load %arg3[%c0_3, %c0_4] : memref<1x128xf32, #tpu.memory_space<vmem>>, vector<1x128xf32>
    %5 = vector.broadcast %4 : vector<1x128xf32> to vector<128x128xf32>
    %6 = arith.addf %3, %5 : vector<128x128xf32>
    %7 = arith.truncf %6 : vector<128x128xf32> to vector<128x128xbf16>
    %cst_5 = arith.constant 1.000980e-01 : bf16
    %8 = vector.broadcast %cst_5 : bf16 to vector<128x128xbf16>
    %9 = arith.mulf %7, %8 : vector<128x128xbf16>
    %10 = arith.maximumf %7, %9 : vector<128x128xbf16>
    %c0_6 = arith.constant 0 : index
    %c0_7 = arith.constant 0 : index
    %11 = vector.load %arg4[%c0_6, %c0_7] : memref<128x128xbf16, #tpu.memory_space<vmem>>, vector<128x128xbf16>
    %cst_8 = arith.constant dense<0.000000e+00> : vector<128x128xf32>
    %12 = tpu.matmul %10, %11, %cst_8 {dimension_numbers = #tpu.dot_dimension_numbers<[1], [0], [0], [1], [0, 0, 1, 1], [], []>} : vector<128x128xbf16>, vector<128x128xbf16>, vector<128x128xf32> -> vector<128x128xf32>
    %c0_9 = arith.constant 0 : index
    %c0_10 = arith.constant 0 : index
    %13 = vector.load %arg5[%c0_9, %c0_10] : memref<1x128xf32, #tpu.memory_space<vmem>>, vector<1x128xf32>
    %14 = vector.broadcast %13 : vector<1x128xf32> to vector<128x128xf32>
    %15 = arith.addf %12, %14 : vector<128x128xf32>
    %cst_11 = arith.constant 1.000000e-01 : f32
    %16 = vector.broadcast %cst_11 : f32 to vector<128x128xf32>
    %17 = arith.mulf %15, %16 : vector<128x128xf32>
    %18 = arith.maximumf %15, %17 : vector<128x128xf32>
    %c0_12 = arith.constant 0 : index
    %c0_13 = arith.constant 0 : index
    %19 = vector.load %arg6[%c0_12, %c0_13] : memref<1x128xf32, #tpu.memory_space<vmem>>, vector<1x128xf32>
    %20 = vector.broadcast %19 : vector<1x128xf32> to vector<128x128xf32>
    %21 = arith.mulf %18, %20 : vector<128x128xf32>
    %cst_14 = arith.constant dense<0.000000e+00> : vector<128xf32>
    %22 = vector.multi_reduction <add>, %21, %cst_14 [1] : vector<128x128xf32> to vector<128xf32>
    %23 = vector.shape_cast %22 : vector<128xf32> to vector<128x1xf32>
    %c0_15 = arith.constant 0 : index
    %c0_16 = arith.constant 0 : index
    %24 = memref.load %arg7[%c0_15, %c0_16] : memref<1x1xf32, #tpu.memory_space<smem>>
    %25 = vector.broadcast %24 : f32 to vector<128x1xf32>
    %26 = arith.addf %23, %25 : vector<128x1xf32>
    %27 = arith.negf %26 : vector<128x1xf32>
    %28 = math.exp %27 : vector<128x1xf32>
    %cst_17 = arith.constant 1.000000e+00 : f32
    %29 = vector.broadcast %cst_17 : f32 to vector<128x1xf32>
    %30 = arith.addf %29, %28 : vector<128x1xf32>
    %31 = arith.divf %29, %30 : vector<128x1xf32>
    %c0_18 = arith.constant 0 : index
    %c0_19 = arith.constant 0 : index
    %32 = vector.load %arg8[%c0_18, %c0_19] : memref<128x1xf32, #tpu.memory_space<vmem>>, vector<128x1xf32>
    tpu.vector_store %arg8[%c0_18, %c0_19], %31 {strides = array<i32>} : memref<128x1xf32, #tpu.memory_space<vmem>>, vector<128x1xf32>,
    return
  }
  func.func @transform_0(%arg0: i32) -> (i32, i32) {
    %c0_i32 = arith.constant 0 : i32
    %c0_i32_0 = arith.constant 0 : i32
    return %arg0, %c0_i32 : i32, i32
  }
  func.func @transform_1(%arg0: i32) -> (i32, i32) {
    %c0_i32 = arith.constant 0 : i32
    %c0_i32_0 = arith.constant 0 : i32
    %c0_i32_1 = arith.constant 0 : i32
    return %c0_i32, %c0_i32_0 : i32, i32
  }
  func.func @transform_2(%arg0: i32) -> (i32, i32) {
    %c0_i32 = arith.constant 0 : i32
    %c0_i32_0 = arith.constant 0 : i32
    %c0_i32_1 = arith.constant 0 : i32
    return %c0_i32, %c0_i32_0 : i32, i32
  }
  func.func @transform_3(%arg0: i32) -> (i32, i32) {
    %c0_i32 = arith.constant 0 : i32
    %c0_i32_0 = arith.constant 0 : i32
    %c0_i32_1 = arith.constant 0 : i32
    return %c0_i32, %c0_i32_0 : i32, i32
  }
  func.func @transform_4(%arg0: i32) -> (i32, i32) {
    %c0_i32 = arith.constant 0 : i32
    %c0_i32_0 = arith.constant 0 : i32
    %c0_i32_1 = arith.constant 0 : i32
    return %c0_i32, %c0_i32_0 : i32, i32
  }
  func.func @transform_5(%arg0: i32) -> (i32, i32) {
    %c0_i32 = arith.constant 0 : i32
    %c0_i32_0 = arith.constant 0 : i32
    %c0_i32_1 = arith.constant 0 : i32
    return %c0_i32, %c0_i32_0 : i32, i32
  }
  func.func @transform_6(%arg0: i32) -> (i32, i32) {
    %c0_i32 = arith.constant 0 : i32
    %c0_i32_0 = arith.constant 0 : i32
    %c0_i32_1 = arith.constant 0 : i32
    return %c0_i32, %c0_i32_0 : i32, i32
  }
  func.func @transform_7(%arg0: i32) -> (i32, i32) {
    %c0_i32 = arith.constant 0 : i32
    %c0_i32_0 = arith.constant 0 : i32
    return %arg0, %c0_i32 : i32, i32
  }
}

</mosaic_0001>

<llo_original>
// kernel: tpu_custom_call.1
$region0: #{tpu_custom_call.1}
  #allocation0 [shape = 'u32[]', space=smem, size = 0x4, offset = 0x4, fixed_abs, tag = 'smem constant byte address 0x4 - core index']
  #allocation1 [shape = 'u32[144,128]{1,0:T(1,128)}', space=vmem, size = 0x12000, scoped, tag = 'internal scratch']
  #allocation2 [shape = 'f32[1,1]{1,0:T(1,128)S(6)}', space=smem, size = 0x200, scoped, tag = 'scoped memory for tpu_custom_call.1']
  %s0 = inlined_call_operand.hbm [shape: f32[200,256], index: 0, kind: input, shape index: {}]
  %s1 = inlined_call_operand.hbm [shape: bf16[256,128], index: 1, kind: input, shape index: {}]
  %s2 = inlined_call_operand.vmem [shape: f32[1,128], index: 2, kind: input, shape index: {}]
  %s3 = inlined_call_operand.hbm [shape: bf16[128,128], index: 3, kind: input, shape index: {}]
  %s4 = inlined_call_operand.vmem [shape: f32[1,128], index: 4, kind: input, shape index: {}]
  %s5 = inlined_call_operand.vmem [shape: f32[1,128], index: 5, kind: input, shape index: {}]
  %s6 = inlined_call_operand.<no memory space> [shape: f32[1,1], index: 6, kind: input, shape index: {}]
  %s7 = inlined_call_operand.vmem [shape: f32[200,1], index: 7, kind: output, shape index: {}]
  %s8 = sld [smem:[#allocation0]]
  $region121: #{tpu_custom_call.1} parent=0
    _
  %s10 = ssub.s32 1, %s8
  %s11 = scalar_select 0, %s10, %s8
  %12 = sst [smem:[#allocation2]] %s6
  $region1: #{tpu_custom_call.1} parent=0
    #allocation3 [shape = 'u8[262144]{0}', space=vmem, size = 0x40000, scoped, tag = 'input window, operand 0']
    #allocation4 [shape = 's32[2]{0}', space=sflag, size = 0x8, scoped, tag = 'scoped memory for tpu_custom_call.1']
    #allocation5 [shape = 'u8[65536]{0}', space=vmem, size = 0x10000, scoped, tag = 'input window, operand 1, single buffered']
    #allocation6 [shape = 's32[1]{0}', space=sflag, size = 0x4, scoped, tag = 'scoped memory for tpu_custom_call.1']
    #allocation7 [shape = 'u8[32768]{0}', space=vmem, size = 0x8000, scoped, tag = 'input window, operand 3, single buffered']
    #allocation8 [shape = 'u8[131072]{0}', space=vmem, size = 0x20000, scoped, tag = 'output window, operand 0']
    %13 = vsyncpa [#allocation4], 0
    %s14 = scalar_lea.sflag [#allocation4], 1
    %15 = vsyncpa %s14, 0
    %16 = vsyncpa [#allocation6], 0
    loop: start=0, step=1, limit=4
    $region2: #{tpu_custom_call.1} parent=1 // loop_pre_header
      _
    $region3: #{tpu_custom_call.1} parent=1 // loop_header
      %s18 = sphi 0, %s22
      %p19 = scmp.ge.s32.totalorder %s18, 4
      %s28 = sphi 0, %s30
      %s31 = sphi 0, %s28
      %s32 = sphi 0, %s31
      %s48 = sphi 0, %s32
      %s52 = sphi 0, %s52
      %s54 = sphi 0, %s52
      %s55 = sphi 0, %s54
      %s69 = sphi 0, %s55
      %s73 = sphi 0, %s73
      %s75 = sphi 0, %s73
      %s76 = sphi 0, %s75
      %s90 = sphi 0, %s76
      %s94 = sphi 0, %s94
      %s96 = sphi 0, %s94
      %s97 = sphi 0, %s96
      %s111 = sphi 0, %s97
      %s115 = sphi 0, %s115
      %s117 = sphi 0, %s115
      %s118 = sphi 0, %s117
      %s132 = sphi 0, %s118
      %s136 = sphi 0, %s136
      %s138 = sphi 0, %s136
      %s139 = sphi 0, %s138
      %s153 = sphi 0, %s139
      %s157 = sphi 0, %s157
      %s159 = sphi 0, %s157
      %s160 = sphi 0, %s159
      %s174 = sphi 0, %s160
      %s180 = sphi 0, %s182
      %s183 = sphi 0, %s180
      %s184 = sphi 0, %s183
      %s200 = sphi 0, %s184
    $region4: #{tpu_custom_call.1} parent=1 // loop_header_branch
      %21 = sbr.rel (%p19) target = $region8
    $region5: #{tpu_custom_call.1} parent=1 // loop_body
      %s23 = ssub.s32 %s18, 1
      %s24 = ssub.s32 %s18, 2
      %s25 = sadd.s32 %s18, 1
      %s26 = ssub.s32 %s18, %s25
      %p27 = scmp.eq.s32.totalorder %s26, 0
      %s29 = sadd.s32 %s28, 1
      %s30 = scalar_select %p27, %s28, %s29
      %p33 = pneg %p27
      %p34 = scmp.eq.s32.totalorder %s18, 1
      %p35 = por %p33, %p34
      %p36 = scmp.ne.s32.totalorder %s28, %s31
      %p37 = scmp.eq.s32.totalorder %s18, 0
      %p38 = por %p36, %p37
      %p39 = scmp.ne.s32.totalorder %s28, %s31
      %p40 = scmp.eq.s32.totalorder %s23, 1
      %p41 = por %p39, %p40
      %p42 = scmp.ne.s32.totalorder %s31, %s32
      %p43 = scmp.eq.s32.totalorder %s23, 0
      %p44 = por %p42, %p43
      %p45 = scmp.ne.s32.totalorder %s31, %s32
      %p46 = scmp.eq.s32.totalorder %s24, 1
      %p47 = por %p45, %p46
      %p49 = scmp.ne.s32.totalorder %s32, %s48
      %p50 = scmp.eq.s32.totalorder %s24, 0
      %p51 = por %p49, %p50
      %s53 = sadd.s32 %s52, 1
      %p56 = scmp.eq.s32.totalorder %s18, 1
      %p57 = scmp.ne.s32.totalorder %s52, %s54
      %p58 = scmp.eq.s32.totalorder %s18, 0
      %p59 = por %p57, %p58
      %p60 = scmp.ne.s32.totalorder %s52, %s54
      %p61 = scmp.eq.s32.totalorder %s23, 1
      %p62 = por %p60, %p61
      %p63 = scmp.ne.s32.totalorder %s54, %s55
      %p64 = scmp.eq.s32.totalorder %s23, 0
      %p65 = por %p63, %p64
      %p66 = scmp.ne.s32.totalorder %s54, %s55
      %p67 = scmp.eq.s32.totalorder %s24, 1
      %p68 = por %p66, %p67
      %p70 = scmp.ne.s32.totalorder %s55, %s69
      %p71 = scmp.eq.s32.totalorder %s24, 0
      %p72 = por %p70, %p71
      %s74 = sadd.s32 %s73, 1
      %p77 = scmp.eq.s32.totalorder %s18, 1
      %p78 = scmp.ne.s32.totalorder %s73, %s75
      %p79 = scmp.eq.s32.totalorder %s18, 0
      %p80 = por %p78, %p79
      %p81 = scmp.ne.s32.totalorder %s73, %s75
      %p82 = scmp.eq.s32.totalorder %s23, 1
      %p83 = por %p81, %p82
      %p84 = scmp.ne.s32.totalorder %s75, %s76
      %p85 = scmp.eq.s32.totalorder %s23, 0
      %p86 = por %p84, %p85
      %p87 = scmp.ne.s32.totalorder %s75, %s76
      %p88 = scmp.eq.s32.totalorder %s24, 1
      %p89 = por %p87, %p88
      %p91 = scmp.ne.s32.totalorder %s76, %s90
      %p92 = scmp.eq.s32.totalorder %s24, 0
      %p93 = por %p91, %p92
      %s95 = sadd.s32 %s94, 1
      %p98 = scmp.eq.s32.totalorder %s18, 1
      %p99 = scmp.ne.s32.totalorder %s94, %s96
      %p100 = scmp.eq.s32.totalorder %s18, 0
      %p101 = por %p99, %p100
      %p102 = scmp.ne.s32.totalorder %s94, %s96
      %p103 = scmp.eq.s32.totalorder %s23, 1
      %p104 = por %p102, %p103
      %p105 = scmp.ne.s32.totalorder %s96, %s97
      %p106 = scmp.eq.s32.totalorder %s23, 0
      %p107 = por %p105, %p106
      %p108 = scmp.ne.s32.totalorder %s96, %s97
      %p109 = scmp.eq.s32.totalorder %s24, 1
      %p110 = por %p108, %p109
      %p112 = scmp.ne.s32.totalorder %s97, %s111
      %p113 = scmp.eq.s32.totalorder %s24, 0
      %p114 = por %p112, %p113
      %s116 = sadd.s32 %s115, 1
      %p119 = scmp.eq.s32.totalorder %s18, 1
      %p120 = scmp.ne.s32.totalorder %s115, %s117
      %p121 = scmp.eq.s32.totalorder %s18, 0
      %p122 = por %p120, %p121
      %p123 = scmp.ne.s32.totalorder %s115, %s117
      %p124 = scmp.eq.s32.totalorder %s23, 1
      %p125 = por %p123, %p124
      %p126 = scmp.ne.s32.totalorder %s117, %s118
      %p127 = scmp.eq.s32.totalorder %s23, 0
      %p128 = por %p126, %p127
      %p129 = scmp.ne.s32.totalorder %s117, %s118
      %p130 = scmp.eq.s32.totalorder %s24, 1
      %p131 = por %p129, %p130
      %p133 = scmp.ne.s32.totalorder %s118, %s132
      %p134 = scmp.eq.s32.totalorder %s24, 0
      %p135 = por %p133, %p134
      %s137 = sadd.s32 %s136, 1
      %p140 = scmp.eq.s32.totalorder %s18, 1
      %p141 = scmp.ne.s32.totalorder %s136, %s138
      %p142 = scmp.eq.s32.totalorder %s18, 0
      %p143 = por %p141, %p142
      %p144 = scmp.ne.s32.totalorder %s136, %s138
      %p145 = scmp.eq.s32.totalorder %s23, 1
      %p146 = por %p144, %p145
      %p147 = scmp.ne.s32.totalorder %s138, %s139
      %p148 = scmp.eq.s32.totalorder %s23, 0
      %p149 = por %p147, %p148
      %p150 = scmp.ne.s32.totalorder %s138, %s139
      %p151 = scmp.eq.s32.totalorder %s24, 1
      %p152 = por %p150, %p151
      %p154 = scmp.ne.s32.totalorder %s139, %s153
      %p155 = scmp.eq.s32.totalorder %s24, 0
      %p156 = por %p154, %p155
      %s158 = sadd.s32 %s157, 1
      %p161 = scmp.eq.s32.totalorder %s18, 1
      %p162 = scmp.ne.s32.totalorder %s157, %s159
      %p163 = scmp.eq.s32.totalorder %s18, 0
      %p164 = por %p162, %p163
      %p165 = scmp.ne.s32.totalorder %s157, %s159
      %p166 = scmp.eq.s32.totalorder %s23, 1
      %p167 = por %p165, %p166
      %p168 = scmp.ne.s32.totalorder %s159, %s160
      %p169 = scmp.eq.s32.totalorder %s23, 0
      %p170 = por %p168, %p169
      %p171 = scmp.ne.s32.totalorder %s159, %s160
      %p172 = scmp.eq.s32.totalorder %s24, 1
      %p173 = por %p171, %p172
      %p175 = scmp.ne.s32.totalorder %s160, %s174
      %p176 = scmp.eq.s32.totalorder %s24, 0
      %p177 = por %p175, %p176
      %s178 = ssub.s32 %s18, %s25
      %p179 = scmp.eq.s32.totalorder %s178, 0
      %s181 = sadd.s32 %s180, 1
      %s182 = scalar_select %p179, %s180, %s181
      %p185 = pneg %p179
      %p186 = scmp.eq.s32.totalorder %s18, 1
      %p187 = por %p185, %p186
      %p188 = scmp.ne.s32.totalorder %s180, %s183
      %p189 = scmp.eq.s32.totalorder %s18, 0
      %p190 = por %p188, %p189
      %p191 = scmp.ne.s32.totalorder %s180, %s183
      %p192 = scmp.eq.s32.totalorder %s23, 1
      %p193 = por %p191, %p192
      %p194 = scmp.ne.s32.totalorder %s183, %s184
      %p195 = scmp.eq.s32.totalorder %s23, 0
      %p196 = por %p194, %p195
      %p197 = scmp.ne.s32.totalorder %s183, %s184
      %p198 = scmp.eq.s32.totalorder %s24, 1
      %p199 = por %p197, %p198
      %p201 = scmp.ne.s32.totalorder %s184, %s200
      %p202 = scmp.eq.s32.totalorder %s24, 0
      %p203 = por %p201, %p202
      %p204 = scmp.le.s32.totalorder 1, %s18
      %p205 = scmp.lt.s32.totalorder %s18, 3
      %p206 = pnand %p204, %p205
      %p207 = pneg %p206
      // Predicated region
      $region9: #{tpu_custom_call.1} parent=5 // pred_check
        _
      $region10: #{tpu_custom_call.1} parent=5 // pred_check_branch
        %209 = sbr.rel (%p206) target = $region12
      $region11: #{tpu_custom_call.1} parent=5 // pred_region
        %s210 = ssub.s32 %s18, 1
        // Predicated region
        $region13: #{tpu_custom_call.1} parent=11 // pred_check
          %p211 = pneg %p65
        $region14: #{tpu_custom_call.1} parent=11 // pred_check_branch
          %213 = sbr.rel (%p211) target = $region16
        $region15: #{tpu_custom_call.1} parent=11 // pred_region
          %s215 = ssub.s32 2048, 2048
          %216 = vsyncadd [#allocation6], %s215
          %s217 = sshll.u32 [#allocation5], 4
          %s218 = int_to_ptr.vmem [resolvable:$true] %s217
          %223 = dma.hbm_to_vmem [thread:$0]  %s1, 2048, %s218, [#allocation6], 64, 64, 4
        $region16: #{tpu_custom_call.1} parent=11 // pred_fallthru
          _
        // Predicated region
        $region17: #{tpu_custom_call.1} parent=11 // pred_check
          %p224 = pneg %p86
        $region18: #{tpu_custom_call.1} parent=11 // pred_check_branch
          %226 = sbr.rel (%p224) target = $region20
        $region19: #{tpu_custom_call.1} parent=11 // pred_region
          _
        $region20: #{tpu_custom_call.1} parent=11 // pred_fallthru
          _
        // Predicated region
        $region21: #{tpu_custom_call.1} parent=11 // pred_check
          %p227 = pneg %p107
        $region22: #{tpu_custom_call.1} parent=11 // pred_check_branch
          %229 = sbr.rel (%p227) target = $region24
        $region23: #{tpu_custom_call.1} parent=11 // pred_region
          %s231 = ssub.s32 1024, 1024
          %232 = vsyncadd [#allocation6], %s231
          %s233 = sshll.u32 [#allocation7], 4
          %s234 = int_to_ptr.vmem [resolvable:$true] %s233
          %239 = dma.hbm_to_vmem [thread:$0]  %s3, 1024, %s234, [#allocation6], 64, 64, 4
        $region24: #{tpu_custom_call.1} parent=11 // pred_fallthru
          _
        // Predicated region
        $region25: #{tpu_custom_call.1} parent=11 // pred_check
          %p240 = pneg %p128
        $region26: #{tpu_custom_call.1} parent=11 // pred_check_branch
          %242 = sbr.rel (%p240) target = $region28
        $region27: #{tpu_custom_call.1} parent=11 // pred_region
          _
        $region28: #{tpu_custom_call.1} parent=11 // pred_fallthru
          _
        // Predicated region
        $region29: #{tpu_custom_call.1} parent=11 // pred_check
          %p243 = pneg %p149
        $region30: #{tpu_custom_call.1} parent=11 // pred_check_branch
          %245 = sbr.rel (%p243) target = $region32
        $region31: #{tpu_custom_call.1} parent=11 // pred_region
          _
        $region32: #{tpu_custom_call.1} parent=11 // pred_fallthru
          _
        // Predicated region
        $region33: #{tpu_custom_call.1} parent=11 // pred_check
          %p246 = pneg %p170
        $region34: #{tpu_custom_call.1} parent=11 // pred_check_branch
          %248 = sbr.rel (%p246) target = $region36
        $region35: #{tpu_custom_call.1} parent=11 // pred_region
          _
        $region36: #{tpu_custom_call.1} parent=11 // pred_fallthru
          _
      $region12: #{tpu_custom_call.1} parent=5 // pred_fallthru
        _
      %p249 = scmp.lt.s32.totalorder %s18, 2
      // Predicated region
      $region37: #{tpu_custom_call.1} parent=5 // pred_check
        %p250 = pneg %p249
      $region38: #{tpu_custom_call.1} parent=5 // pred_check_branch
        %252 = sbr.rel (%p250) target = $region40
      $region39: #{tpu_custom_call.1} parent=5 // pred_region
        // Predicated region
        $region41: #{tpu_custom_call.1} parent=39 // pred_check
          %p253 = pneg %p38
        $region42: #{tpu_custom_call.1} parent=39 // pred_check_branch
          %255 = sbr.rel (%p253) target = $region44
        $region43: #{tpu_custom_call.1} parent=39 // pred_region
          %s256 = sand.u32 %s28, 1
          %s257 = scalar_lea.sflag [#allocation4], %s256
          %s258 = sand.u32 %s28, 1
          %s259 = smul.addr %s258, 256
          %s260 = scalar_lea.vmem [#allocation3], %s259
          %s261 = smul.u32 16, %s18
          %s262 = ssub.s32 25, %s261
          %p263 = scmp.lt.s32.totalorder %s262, 16
          %s264 = scalar_select %p263, %s262, 16
          %s265 = smul.u32 128, %s264
          %s266 = smul.u32 %s265, 2
          %s268 = ssub.s32 4096, %s266
          %269 = vsyncadd %s257, %s268
          %p270 = scmp.ne.s32.totalorder 0, %s266
          %s271 = smul.addr %s261, 2
          %s272 = smul.addr %s271, 128
          %s273 = scalar_lea.hbm %s0, %s272
          %s274 = smul.u32 16, %s264
          %s275 = sshll.u32 %s260, 4
          %s276 = int_to_ptr.vmem [resolvable:$true] %s275
          %s277 = sshll.u32 %s274, 4
          %281 = dma.hbm_to_vmem [thread:$0]  (%p270), %s273, %s277, %s276, %s257, 256, 256, 16
        $region44: #{tpu_custom_call.1} parent=39 // pred_fallthru
          _
      $region40: #{tpu_custom_call.1} parent=5 // pred_fallthru
        _
      %p282 = scmp.le.s32.totalorder 1, %s18
      %p283 = scmp.lt.s32.totalorder %s18, 3
      %p284 = pnand %p282, %p283
      %p285 = pneg %p284
      // Predicated region
      $region45: #{tpu_custom_call.1} parent=5 // pred_check
        _
      $region46: #{tpu_custom_call.1} parent=5 // pred_check_branch
        %287 = sbr.rel (%p284) target = $region48
      $region47: #{tpu_custom_call.1} parent=5 // pred_region
        %s288 = ssub.s32 %s18, 1
        %s289 = sand.u32 %s31, 1
        %s290 = scalar_lea.sflag [#allocation4], %s289
        %s291 = sand.u32 %s31, 1
        %s292 = smul.addr %s291, 256
        %s293 = scalar_lea.vmem [#allocation3], %s292
        // Predicated region
        $region49: #{tpu_custom_call.1} parent=47 // pred_check
          %p294 = pneg %p44
        $region50: #{tpu_custom_call.1} parent=47 // pred_check_branch
          %296 = sbr.rel (%p294) target = $region52
        $region51: #{tpu_custom_call.1} parent=47 // pred_region
          %297 = dma.done %s290, 4096
        $region52: #{tpu_custom_call.1} parent=47 // pred_fallthru
          _
        // Predicated region
        $region53: #{tpu_custom_call.1} parent=47 // pred_check
          %p298 = pneg %p65
        $region54: #{tpu_custom_call.1} parent=47 // pred_check_branch
          %300 = sbr.rel (%p298) target = $region56
        $region55: #{tpu_custom_call.1} parent=47 // pred_region
          %301 = dma.done [#allocation6], 2048
        $region56: #{tpu_custom_call.1} parent=47 // pred_fallthru
          _
        // Predicated region
        $region57: #{tpu_custom_call.1} parent=47 // pred_check
          %p302 = pneg %p107
        $region58: #{tpu_custom_call.1} parent=47 // pred_check_branch
          %304 = sbr.rel (%p302) target = $region60
        $region59: #{tpu_custom_call.1} parent=47 // pred_region
          %305 = dma.done [#allocation6], 1024
        $region60: #{tpu_custom_call.1} parent=47 // pred_fallthru
          _
        %s306 = sand.u32 %s31, 1
        %s307 = scalar_lea.sflag [#allocation4], %s306
        %s308 = sand.u32 %s31, 1
        %s309 = smul.addr %s308, 256
        %s310 = scalar_lea.vmem [#allocation3], %s309
        %p311 = pneg %p44
        %p312 = pneg %p41
        %p313 = pneg %p65
        %p314 = pneg %p62
        %p315 = pneg %p86
        %p316 = pneg %p83
        %p317 = pneg %p107
        %p318 = pneg %p104
        %p319 = pneg %p128
        %p320 = pneg %p125
        %p321 = pneg %p149
        %p322 = pneg %p146
        %p323 = pneg %p170
        %p324 = pneg %p167
        %p325 = pneg %p196
        %p326 = pneg %p193
        %s327 = sand.u32 %s183, 1
        %s328 = sand.u32 %s183, 1
        %s329 = smul.addr %s328, 128
        %s330 = scalar_lea.vmem [#allocation8], %s329
        %s331 = smul.u32 16, %s23
        %s332 = ssub.s32 25, %s331
        %p333 = scmp.lt.s32.totalorder %s332, 16
        %s334 = scalar_select %p333, %s332, 16
        %s335 = smul.u32 128, %s334
        %s336 = smul.u32 %s335, 2
        %s337 = smul.u32 16, %s23
        %s338 = ssub.s32 25, %s337
        %p339 = scmp.lt.s32.totalorder %s338, 16
        %s340 = scalar_select %p339, %s338, 16
        %s341 = smul.u32 128, %s340
        %v344 = vld [vmem:[%s293] sm:$0xff]
        %v345 = vld [vmem:[%s293 + $0x8] sm:$0xff]
        %v346 = vld [vmem:[%s293 + $0x10] sm:$0xff]
        %v347 = vld [vmem:[%s293 + $0x18] sm:$0xff]
        %v348 = vld [vmem:[%s293 + $0x20] sm:$0xff]
        %v349 = vld [vmem:[%s293 + $0x28] sm:$0xff]
        %v350 = vld [vmem:[%s293 + $0x30] sm:$0xff]
        %v351 = vld [vmem:[%s293 + $0x38] sm:$0xff]
        %v352 = vld [vmem:[%s293 + $0x40] sm:$0xff]
        %v353 = vld [vmem:[%s293 + $0x48] sm:$0xff]
        %v354 = vld [vmem:[%s293 + $0x50] sm:$0xff]
        %v355 = vld [vmem:[%s293 + $0x58] sm:$0xff]
        %v356 = vld [vmem:[%s293 + $0x60] sm:$0xff]
        %v357 = vld [vmem:[%s293 + $0x68] sm:$0xff]
        %v358 = vld [vmem:[%s293 + $0x70] sm:$0xff]
        %v359 = vld [vmem:[%s293 + $0x78] sm:$0xff]
        %v360 = vld [vmem:[%s293 + $0x80] sm:$0xff]
        %v361 = vld [vmem:[%s293 + $0x88] sm:$0xff]
        %v362 = vld [vmem:[%s293 + $0x90] sm:$0xff]
        %v363 = vld [vmem:[%s293 + $0x98] sm:$0xff]
        %v364 = vld [vmem:[%s293 + $0xa0] sm:$0xff]
        %v365 = vld [vmem:[%s293 + $0xa8] sm:$0xff]
        %v366 = vld [vmem:[%s293 + $0xb0] sm:$0xff]
        %v367 = vld [vmem:[%s293 + $0xb8] sm:$0xff]
        %v368 = vld [vmem:[%s293 + $0xc0] sm:$0xff]
        %v369 = vld [vmem:[%s293 + $0xc8] sm:$0xff]
        %v370 = vld [vmem:[%s293 + $0xd0] sm:$0xff]
        %v371 = vld [vmem:[%s293 + $0xd8] sm:$0xff]
        %v372 = vld [vmem:[%s293 + $0xe0] sm:$0xff]
        %v373 = vld [vmem:[%s293 + $0xe8] sm:$0xff]
        %v374 = vld [vmem:[%s293 + $0xf0] sm:$0xff]
        %v375 = vld [vmem:[%s293 + $0xf8] sm:$0xff]
        %v376 = vpack.c.bf16 %v346, %v344
        %v377 = vpack.c.bf16 %v347, %v345
        %v378 = vpack.c.bf16 %v350, %v348
        %v379 = vpack.c.bf16 %v351, %v349
        %v380 = vpack.c.bf16 %v354, %v352
        %v381 = vpack.c.bf16 %v355, %v353
        %v382 = vpack.c.bf16 %v358, %v356
        %v383 = vpack.c.bf16 %v359, %v357
        %v384 = vpack.c.bf16 %v362, %v360
        %v385 = vpack.c.bf16 %v363, %v361
        %v386 = vpack.c.bf16 %v366, %v364
        %v387 = vpack.c.bf16 %v367, %v365
        %v388 = vpack.c.bf16 %v370, %v368
        %v389 = vpack.c.bf16 %v371, %v369
        %v390 = vpack.c.bf16 %v374, %v372
        %v391 = vpack.c.bf16 %v375, %v373
        %v392 = vld [vmem:[#allocation5] sm:$0xf]
        %v393 = vld [vmem:[#allocation5 + $0x4] sm:$0xf]
        %v394 = vld [vmem:[#allocation5 + $0x8] sm:$0xf]
        %v395 = vld [vmem:[#allocation5 + $0xc] sm:$0xf]
        %v396 = vld [vmem:[#allocation5 + $0x10] sm:$0xf]
        %v397 = vld [vmem:[#allocation5 + $0x14] sm:$0xf]
        %v398 = vld [vmem:[#allocation5 + $0x18] sm:$0xf]
        %v399 = vld [vmem:[#allocation5 + $0x1c] sm:$0xf]
        %v400 = vld [vmem:[#allocation5 + $0x20] sm:$0xf]
        %v401 = vld [vmem:[#allocation5 + $0x24] sm:$0xf]
        %v402 = vld [vmem:[#allocation5 + $0x28] sm:$0xf]
        %v403 = vld [vmem:[#allocation5 + $0x2c] sm:$0xf]
        %v404 = vld [vmem:[#allocation5 + $0x30] sm:$0xf]
        %v405 = vld [vmem:[#allocation5 + $0x34] sm:$0xf]
        %v406 = vld [vmem:[#allocation5 + $0x38] sm:$0xf]
        %v407 = vld [vmem:[#allocation5 + $0x3c] sm:$0xf]
        %v408 = vld [vmem:[#allocation5 + $0x40] sm:$0xf]
        %v409 = vld [vmem:[#allocation5 + $0x44] sm:$0xf]
        %v410 = vld [vmem:[#allocation5 + $0x48] sm:$0xf]
        %v411 = vld [vmem:[#allocation5 + $0x4c] sm:$0xf]
        %v412 = vld [vmem:[#allocation5 + $0x50] sm:$0xf]
        %v413 = vld [vmem:[#allocation5 + $0x54] sm:$0xf]
        %v414 = vld [vmem:[#allocation5 + $0x58] sm:$0xf]
        %v415 = vld [vmem:[#allocation5 + $0x5c] sm:$0xf]
        %v416 = vld [vmem:[#allocation5 + $0x60] sm:$0xf]
        %v417 = vld [vmem:[#allocation5 + $0x64] sm:$0xf]
        %v418 = vld [vmem:[#allocation5 + $0x68] sm:$0xf]
        %v419 = vld [vmem:[#allocation5 + $0x6c] sm:$0xf]
        %v420 = vld [vmem:[#allocation5 + $0x70] sm:$0xf]
        %v421 = vld [vmem:[#allocation5 + $0x74] sm:$0xf]
        %v422 = vld [vmem:[#allocation5 + $0x78] sm:$0xf]
        %v423 = vld [vmem:[#allocation5 + $0x7c] sm:$0xf]
        %v424 = vld [vmem:[%s2] sm:$0x1]
        %v426 = vlaneseq
        %v427 = vshrl.u32 %v426, 7
        %v428 = vsub.s32 0, %v427
        %v429 = vrot.slane %v424, %v428
        %v463 = vunpack.c.l.b16 %v392
        %v464 = vunpack.c.l.b16 %v393
        %v465 = vunpack.c.l.b16 %v394
        %v466 = vunpack.c.l.b16 %v395
        %v467 = vunpack.c.l.b16 %v396
        %v468 = vunpack.c.l.b16 %v397
        %v469 = vunpack.c.l.b16 %v398
        %v470 = vunpack.c.l.b16 %v399
        %v471 = vunpack.c.l.b16 %v400
        %v472 = vunpack.c.l.b16 %v401
        %v473 = vunpack.c.l.b16 %v402
        %v474 = vunpack.c.l.b16 %v403
        %v475 = vunpack.c.l.b16 %v404
        %v476 = vunpack.c.l.b16 %v405
        %v477 = vunpack.c.l.b16 %v406
        %v478 = vunpack.c.l.b16 %v407
        %v479 = vunpack.c.l.b16 %v408
        %v480 = vunpack.c.l.b16 %v409
        %v481 = vunpack.c.l.b16 %v410
        %v482 = vunpack.c.l.b16 %v411
        %v483 = vunpack.c.l.b16 %v412
        %v484 = vunpack.c.l.b16 %v413
        %v485 = vunpack.c.l.b16 %v414
        %v486 = vunpack.c.l.b16 %v415
        %v487 = vunpack.c.l.b16 %v416
        %v488 = vunpack.c.l.b16 %v417
        %v489 = vunpack.c.l.b16 %v418
        %v490 = vunpack.c.l.b16 %v419
        %v491 = vunpack.c.l.b16 %v420
        %v492 = vunpack.c.l.b16 %v421
        %v493 = vunpack.c.l.b16 %v422
        %v494 = vunpack.c.l.b16 %v423
        %v495 = vpack.c.b16 %v464, %v463
        %v496 = vpack.c.b16 %v466, %v465
        %v497 = vpack.c.b16 %v468, %v467
        %v498 = vpack.c.b16 %v470, %v469
        %v499 = vpack.c.b16 %v472, %v471
        %v500 = vpack.c.b16 %v474, %v473
        %v501 = vpack.c.b16 %v476, %v475
        %v502 = vpack.c.b16 %v478, %v477
        %v503 = vpack.c.b16 %v480, %v479
        %v504 = vpack.c.b16 %v482, %v481
        %v505 = vpack.c.b16 %v484, %v483
        %v506 = vpack.c.b16 %v486, %v485
        %v507 = vpack.c.b16 %v488, %v487
        %v508 = vpack.c.b16 %v490, %v489
        %v509 = vpack.c.b16 %v492, %v491
        %v510 = vpack.c.b16 %v494, %v493
        %527 = vmatprep.subr.bf16.mxu0 0
        %528 = vmatpush1.bf16.msra.mxu0 %v495
        %529 = vmatprep.subr.bf16.mxu0 0
        %530 = vmatpush1.bf16.msra.mxu0 %v496
        %531 = vmatprep.subr.bf16.mxu0 0
        %532 = vmatpush1.bf16.msra.mxu0 %v497
        %533 = vmatprep.subr.bf16.mxu0 0
        %534 = vmatpush1.bf16.msra.mxu0 %v498
        %535 = vmatprep.subr.bf16.mxu0 0
        %536 = vmatpush1.bf16.msra.mxu0 %v499
        %537 = vmatprep.subr.bf16.mxu0 0
        %538 = vmatpush1.bf16.msra.mxu0 %v500
        %539 = vmatprep.subr.bf16.mxu0 0
        %540 = vmatpush1.bf16.msra.mxu0 %v501
        %541 = vmatprep.subr.bf16.mxu0 0
        %542 = vmatpush1.bf16.msra.mxu0 %v502
        %543 = vmatprep.subr.bf16.mxu0 0
        %544 = vmatpush1.bf16.msra.mxu0 %v503
        %545 = vmatprep.subr.bf16.mxu0 0
        %546 = vmatpush1.bf16.msra.mxu0 %v504
        %547 = vmatprep.subr.bf16.mxu0 0
        %548 = vmatpush1.bf16.msra.mxu0 %v505
        %549 = vmatprep.subr.bf16.mxu0 0
        %550 = vmatpush1.bf16.msra.mxu0 %v506
        %551 = vmatprep.subr.bf16.mxu0 0
        %552 = vmatpush1.bf16.msra.mxu0 %v507
        %553 = vmatprep.subr.bf16.mxu0 0
        %554 = vmatpush1.bf16.msra.mxu0 %v508
        %555 = vmatprep.subr.bf16.mxu0 0
        %556 = vmatpush1.bf16.msra.mxu0 %v509
        %557 = vmatprep.subr.bf16.mxu0 0
        %558 = vmatpush1.bf16.msra.mxu0 %v510
        %559 = vmatprep.mubr.bf16.mxu0 %v377
        %560 = vmatmul.mubr.bf16.gmra.mrb[0].mxu0 %v376
        %v561 = vpop.f32.mrb[0].mxu0
        %v562 = vadd.f32 %v429, %v561
        %v563 = vpop.f32.mrb[0].mxu0
        %v564 = vpop.f32.mrb[0].mxu0
        %v565 = vadd.f32 %v429, %v564
        %v566 = vpop.f32.mrb[0].mxu0
        %567 = vmatprep.mubr.bf16.mxu0 %v379
        %568 = vmatmul.mubr.bf16.gmra.mrb[0].mxu0 %v378
        %v569 = vpop.f32.mrb[0].mxu0
        %v570 = vadd.f32 %v429, %v569
        %v571 = vpop.f32.mrb[0].mxu0
        %v572 = vpop.f32.mrb[0].mxu0
        %v573 = vadd.f32 %v429, %v572
        %v574 = vpop.f32.mrb[0].mxu0
        %575 = vmatprep.mubr.bf16.mxu0 %v381
        %576 = vmatmul.mubr.bf16.gmra.mrb[0].mxu0 %v380
        %v577 = vpop.f32.mrb[0].mxu0
        %v578 = vadd.f32 %v429, %v577
        %v579 = vpop.f32.mrb[0].mxu0
        %v580 = vpop.f32.mrb[0].mxu0
        %v581 = vadd.f32 %v429, %v580
        %v582 = vpop.f32.mrb[0].mxu0
        %583 = vmatprep.mubr.bf16.mxu0 %v383
        %584 = vmatmul.mubr.bf16.gmra.mrb[0].mxu0 %v382
        %v585 = vpop.f32.mrb[0].mxu0
        %v586 = vadd.f32 %v429, %v585
        %v587 = vpop.f32.mrb[0].mxu0
        %v588 = vpop.f32.mrb[0].mxu0
        %v589 = vadd.f32 %v429, %v588
        %v590 = vpop.f32.mrb[0].mxu0
        %591 = vmatprep.mubr.bf16.mxu0 %v385
        %592 = vmatmul.mubr.bf16.gmra.mrb[0].mxu0 %v384
        %v593 = vpop.f32.mrb[0].mxu0
        %v594 = vadd.f32 %v429, %v593
        %v595 = vpop.f32.mrb[0].mxu0
        %v596 = vpop.f32.mrb[0].mxu0
        %v597 = vadd.f32 %v429, %v596
        %v598 = vpop.f32.mrb[0].mxu0
        %599 = vmatprep.mubr.bf16.mxu0 %v387
        %600 = vmatmul.mubr.bf16.gmra.mrb[0].mxu0 %v386
        %v601 = vpop.f32.mrb[0].mxu0
        %v602 = vadd.f32 %v429, %v601
        %v603 = vpop.f32.mrb[0].mxu0
        %v604 = vpop.f32.mrb[0].mxu0
        %v605 = vadd.f32 %v429, %v604
        %v606 = vpop.f32.mrb[0].mxu0
        %607 = vmatprep.mubr.bf16.mxu0 %v389
        %608 = vmatmul.mubr.bf16.gmra.mrb[0].mxu0 %v388
        %v609 = vpop.f32.mrb[0].mxu0
        %v610 = vadd.f32 %v429, %v609
        %v611 = vpop.f32.mrb[0].mxu0
        %v612 = vpop.f32.mrb[0].mxu0
        %v613 = vadd.f32 %v429, %v612
        %v614 = vpop.f32.mrb[0].mxu0
        %615 = vmatprep.mubr.bf16.mxu0 %v391
        %616 = vmatmul.mubr.bf16.gmra.mrb[0].mxu0 %v390
        %v617 = vpop.f32.mrb[0].mxu0
        %v618 = vadd.f32 %v429, %v617
        %v619 = vpop.f32.mrb[0].mxu0
        %v620 = vpop.f32.mrb[0].mxu0
        %v621 = vadd.f32 %v429, %v620
        %v622 = vpop.f32.mrb[0].mxu0
        %623 = vdwg.mxu0
        %v624 = vpack.c.bf16 %v565, %v562
        %v625 = vpack.c.bf16 %v573, %v570
        %v626 = vpack.c.bf16 %v581, %v578
        %v627 = vpack.c.bf16 %v589, %v586
        %v628 = vpack.c.bf16 %v597, %v594
        %v629 = vpack.c.bf16 %v605, %v602
        %v630 = vpack.c.bf16 %v613, %v610
        %v631 = vpack.c.bf16 %v621, %v618
        %v632 = vmul.bf16 %v624, 1036860877
        %v633 = vmul.bf16 %v625, 1036860877
        %v634 = vmul.bf16 %v626, 1036860877
        %v635 = vmul.bf16 %v627, 1036860877
        %v636 = vmul.bf16 %v628, 1036860877
        %v637 = vmul.bf16 %v629, 1036860877
        %v638 = vmul.bf16 %v630, 1036860877
        %v639 = vmul.bf16 %v631, 1036860877
        %v640 = vmax.bf16 %v624, %v632
        %v641 = vmax.bf16 %v625, %v633
        %v642 = vmax.bf16 %v626, %v634
        %v643 = vmax.bf16 %v627, %v635
        %v644 = vmax.bf16 %v628, %v636
        %v645 = vmax.bf16 %v629, %v637
        %v646 = vmax.bf16 %v630, %v638
        %v647 = vmax.bf16 %v631, %v639
        %v648 = vld [vmem:[#allocation7] sm:$0xf]
        %v649 = vld [vmem:[#allocation7 + $0x4] sm:$0xf]
        %v650 = vld [vmem:[#allocation7 + $0x8] sm:$0xf]
        %v651 = vld [vmem:[#allocation7 + $0xc] sm:$0xf]
        %v652 = vld [vmem:[#allocation7 + $0x10] sm:$0xf]
        %v653 = vld [vmem:[#allocation7 + $0x14] sm:$0xf]
        %v654 = vld [vmem:[#allocation7 + $0x18] sm:$0xf]
        %v655 = vld [vmem:[#allocation7 + $0x1c] sm:$0xf]
        %v656 = vld [vmem:[#allocation7 + $0x20] sm:$0xf]
        %v657 = vld [vmem:[#allocation7 + $0x24] sm:$0xf]
        %v658 = vld [vmem:[#allocation7 + $0x28] sm:$0xf]
        %v659 = vld [vmem:[#allocation7 + $0x2c] sm:$0xf]
        %v660 = vld [vmem:[#allocation7 + $0x30] sm:$0xf]
        %v661 = vld [vmem:[#allocation7 + $0x34] sm:$0xf]
        %v662 = vld [vmem:[#allocation7 + $0x38] sm:$0xf]
        %v663 = vld [vmem:[#allocation7 + $0x3c] sm:$0xf]
        %v664 = vld [vmem:[%s4] sm:$0x1]
        %v666 = vlaneseq
        %v667 = vshrl.u32 %v666, 7
        %v668 = vsub.s32 0, %v667
        %v669 = vrot.slane %v664, %v668
        %v687 = vunpack.c.l.b16 %v648
        %v688 = vunpack.c.l.b16 %v649
        %v689 = vunpack.c.l.b16 %v650
        %v690 = vunpack.c.l.b16 %v651
        %v691 = vunpack.c.l.b16 %v652
        %v692 = vunpack.c.l.b16 %v653
        %v693 = vunpack.c.l.b16 %v654
        %v694 = vunpack.c.l.b16 %v655
        %v695 = vunpack.c.l.b16 %v656
        %v696 = vunpack.c.l.b16 %v657
        %v697 = vunpack.c.l.b16 %v658
        %v698 = vunpack.c.l.b16 %v659
        %v699 = vunpack.c.l.b16 %v660
        %v700 = vunpack.c.l.b16 %v661
        %v701 = vunpack.c.l.b16 %v662
        %v702 = vunpack.c.l.b16 %v663
        %v703 = vpack.c.b16 %v688, %v687
        %v704 = vpack.c.b16 %v690, %v689
        %v705 = vpack.c.b16 %v692, %v691
        %v706 = vpack.c.b16 %v694, %v693
        %v707 = vpack.c.b16 %v696, %v695
        %v708 = vpack.c.b16 %v698, %v697
        %v709 = vpack.c.b16 %v700, %v699
        %v710 = vpack.c.b16 %v702, %v701
        %719 = vmatprep.subr.bf16.mxu0 0
        %720 = vmatpush1.bf16.msra.mxu0 %v703
        %721 = vmatprep.subr.bf16.mxu0 0
        %722 = vmatpush1.bf16.msra.mxu0 %v704
        %723 = vmatprep.subr.bf16.mxu0 0
        %724 = vmatpush1.bf16.msra.mxu0 %v705
        %725 = vmatprep.subr.bf16.mxu0 0
        %726 = vmatpush1.bf16.msra.mxu0 %v706
        %727 = vmatprep.subr.bf16.mxu0 0
        %728 = vmatpush1.bf16.msra.mxu0 %v707
        %729 = vmatprep.subr.bf16.mxu0 0
        %730 = vmatpush1.bf16.msra.mxu0 %v708
        %731 = vmatprep.subr.bf16.mxu0 0
        %732 = vmatpush1.bf16.msra.mxu0 %v709
        %733 = vmatprep.subr.bf16.mxu0 0
        %734 = vmatpush1.bf16.msra.mxu0 %v710
        %735 = vmatprep.subr.bf16.mxu0 0
        %736 = vmatpush1.bf16.msra.mxu0 0
        %737 = vmatprep.subr.bf16.mxu0 0
        %738 = vmatpush1.bf16.msra.mxu0 0
        %739 = vmatprep.subr.bf16.mxu0 0
        %740 = vmatpush1.bf16.msra.mxu0 0
        %741 = vmatprep.subr.bf16.mxu0 0
        %742 = vmatpush1.bf16.msra.mxu0 0
        %743 = vmatprep.subr.bf16.mxu0 0
        %744 = vmatpush1.bf16.msra.mxu0 0
        %745 = vmatprep.subr.bf16.mxu0 0
        %746 = vmatpush1.bf16.msra.mxu0 0
        %747 = vmatprep.subr.bf16.mxu0 0
        %748 = vmatpush1.bf16.msra.mxu0 0
        %749 = vmatprep.subr.bf16.mxu0 0
        %750 = vmatpush1.bf16.msra.mxu0 0
        %751 = vmatprep.mubr.bf16.mxu0 0
        %752 = vmatmul.mubr.bf16.gmra.mrb[0].mxu0 %v640
        %v753 = vpop.f32.mrb[0].mxu0
        %v754 = vadd.f32 %v669, %v753
        %v755 = vpop.f32.mrb[0].mxu0
        %v756 = vpop.f32.mrb[0].mxu0
        %v757 = vadd.f32 %v669, %v756
        %v758 = vpop.f32.mrb[0].mxu0
        %759 = vmatprep.mubr.bf16.mxu0 0
        %760 = vmatmul.mubr.bf16.gmra.mrb[0].mxu0 %v641
        %v761 = vpop.f32.mrb[0].mxu0
        %v762 = vadd.f32 %v669, %v761
        %v763 = vpop.f32.mrb[0].mxu0
        %v764 = vpop.f32.mrb[0].mxu0
        %v765 = vadd.f32 %v669, %v764
        %v766 = vpop.f32.mrb[0].mxu0
        %767 = vmatprep.mubr.bf16.mxu0 0
        %768 = vmatmul.mubr.bf16.gmra.mrb[0].mxu0 %v642
        %v769 = vpop.f32.mrb[0].mxu0
        %v770 = vadd.f32 %v669, %v769
        %v771 = vpop.f32.mrb[0].mxu0
        %v772 = vpop.f32.mrb[0].mxu0
        %v773 = vadd.f32 %v669, %v772
        %v774 = vpop.f32.mrb[0].mxu0
        %775 = vmatprep.mubr.bf16.mxu0 0
        %776 = vmatmul.mubr.bf16.gmra.mrb[0].mxu0 %v643
        %v777 = vpop.f32.mrb[0].mxu0
        %v778 = vadd.f32 %v669, %v777
        %v779 = vpop.f32.mrb[0].mxu0
        %v780 = vpop.f32.mrb[0].mxu0
        %v781 = vadd.f32 %v669, %v780
        %v782 = vpop.f32.mrb[0].mxu0
        %783 = vmatprep.mubr.bf16.mxu0 0
        %784 = vmatmul.mubr.bf16.gmra.mrb[0].mxu0 %v644
        %v785 = vpop.f32.mrb[0].mxu0
        %v786 = vadd.f32 %v669, %v785
        %v787 = vpop.f32.mrb[0].mxu0
        %v788 = vpop.f32.mrb[0].mxu0
        %v789 = vadd.f32 %v669, %v788
        %v790 = vpop.f32.mrb[0].mxu0
        %791 = vmatprep.mubr.bf16.mxu0 0
        %792 = vmatmul.mubr.bf16.gmra.mrb[0].mxu0 %v645
        %v793 = vpop.f32.mrb[0].mxu0
        %v794 = vadd.f32 %v669, %v793
        %v795 = vpop.f32.mrb[0].mxu0
        %v796 = vpop.f32.mrb[0].mxu0
        %v797 = vadd.f32 %v669, %v796
        %v798 = vpop.f32.mrb[0].mxu0
        %799 = vmatprep.mubr.bf16.mxu0 0
        %800 = vmatmul.mubr.bf16.gmra.mrb[0].mxu0 %v646
        %v801 = vpop.f32.mrb[0].mxu0
        %v802 = vadd.f32 %v669, %v801
        %v803 = vpop.f32.mrb[0].mxu0
        %v804 = vpop.f32.mrb[0].mxu0
        %v805 = vadd.f32 %v669, %v804
        %v806 = vpop.f32.mrb[0].mxu0
        %807 = vmatprep.mubr.bf16.mxu0 0
        %808 = vmatmul.mubr.bf16.gmra.mrb[0].mxu0 %v647
        %v809 = vpop.f32.mrb[0].mxu0
        %v810 = vadd.f32 %v669, %v809
        %v811 = vpop.f32.mrb[0].mxu0
        %v812 = vpop.f32.mrb[0].mxu0
        %v813 = vadd.f32 %v669, %v812
        %v814 = vpop.f32.mrb[0].mxu0
        %815 = vdwg.mxu0
        %v816 = vmul.f32 %v754, 0.1
        %v817 = vmul.f32 %v757, 0.1
        %v818 = vmul.f32 %v762, 0.1
        %v819 = vmul.f32 %v765, 0.1
        %v820 = vmul.f32 %v770, 0.1
        %v821 = vmul.f32 %v773, 0.1
        %v822 = vmul.f32 %v778, 0.1
        %v823 = vmul.f32 %v781, 0.1
        %v824 = vmul.f32 %v786, 0.1
        %v825 = vmul.f32 %v789, 0.1
        %v826 = vmul.f32 %v794, 0.1
        %v827 = vmul.f32 %v797, 0.1
        %v828 = vmul.f32 %v802, 0.1
        %v829 = vmul.f32 %v805, 0.1
        %v830 = vmul.f32 %v810, 0.1
        %v831 = vmul.f32 %v813, 0.1
        %v832 = vmax.f32 %v754, %v816
        %v833 = vmax.f32 %v757, %v817
        %v834 = vmax.f32 %v762, %v818
        %v835 = vmax.f32 %v765, %v819
        %v836 = vmax.f32 %v770, %v820
        %v837 = vmax.f32 %v773, %v821
        %v838 = vmax.f32 %v778, %v822
        %v839 = vmax.f32 %v781, %v823
        %v840 = vmax.f32 %v786, %v824
        %v841 = vmax.f32 %v789, %v825
        %v842 = vmax.f32 %v794, %v826
        %v843 = vmax.f32 %v797, %v827
        %v844 = vmax.f32 %v802, %v828
        %v845 = vmax.f32 %v805, %v829
        %v846 = vmax.f32 %v810, %v830
        %v847 = vmax.f32 %v813, %v831
        %v848 = vld [vmem:[%s5] sm:$0x1]
        %v850 = vlaneseq
        %v851 = vshrl.u32 %v850, 7
        %v852 = vsub.s32 0, %v851
        %v853 = vrot.slane %v848, %v852
        %v855 = vmul.f32 %v832, %v853
        %v856 = vmul.f32 %v833, %v853
        %v857 = vmul.f32 %v834, %v853
        %v858 = vmul.f32 %v835, %v853
        %v859 = vmul.f32 %v836, %v853
        %v860 = vmul.f32 %v837, %v853
        %v861 = vmul.f32 %v838, %v853
        %v862 = vmul.f32 %v839, %v853
        %v863 = vmul.f32 %v840, %v853
        %v864 = vmul.f32 %v841, %v853
        %v865 = vmul.f32 %v842, %v853
        %v866 = vmul.f32 %v843, %v853
        %v867 = vmul.f32 %v844, %v853
        %v868 = vmul.f32 %v845, %v853
        %v869 = vmul.f32 %v846, %v853
        %v870 = vmul.f32 %v847, %v853
        %871 = vadd.xlane.f32.xlu0 %v855
        %v872 = vpop.xlane.xlu0 %871
        %873 = vadd.xlane.f32.xlu0 %v856
        %v874 = vpop.xlane.xlu0 %873
        %875 = vadd.xlane.f32.xlu0 %v857
        %v876 = vpop.xlane.xlu0 %875
        %877 = vadd.xlane.f32.xlu0 %v858
        %v878 = vpop.xlane.xlu0 %877
        %879 = vadd.xlane.f32.xlu0 %v859
        %v880 = vpop.xlane.xlu0 %879
        %881 = vadd.xlane.f32.xlu0 %v860
        %v882 = vpop.xlane.xlu0 %881
        %883 = vadd.xlane.f32.xlu0 %v861
        %v884 = vpop.xlane.xlu0 %883
        %885 = vadd.xlane.f32.xlu0 %v862
        %v886 = vpop.xlane.xlu0 %885
        %887 = vadd.xlane.f32.xlu0 %v863
        %v888 = vpop.xlane.xlu0 %887
        %889 = vadd.xlane.f32.xlu0 %v864
        %v890 = vpop.xlane.xlu0 %889
        %891 = vadd.xlane.f32.xlu0 %v865
        %v892 = vpop.xlane.xlu0 %891
        %893 = vadd.xlane.f32.xlu0 %v866
        %v894 = vpop.xlane.xlu0 %893
        %895 = vadd.xlane.f32.xlu0 %v867
        %v896 = vpop.xlane.xlu0 %895
        %897 = vadd.xlane.f32.xlu0 %v868
        %v898 = vpop.xlane.xlu0 %897
        %899 = vadd.xlane.f32.xlu0 %v869
        %v900 = vpop.xlane.xlu0 %899
        %901 = vadd.xlane.f32.xlu0 %v870
        %v902 = vpop.xlane.xlu0 %901
        %s903 = sld [smem:[#allocation2]]
        %v904 = vstv %s903
        %v905 = vadd.f32 %v872, %v904
        %v906 = vadd.f32 %v874, %v904
        %v907 = vadd.f32 %v876, %v904
        %v908 = vadd.f32 %v878, %v904
        %v909 = vadd.f32 %v880, %v904
        %v910 = vadd.f32 %v882, %v904
        %v911 = vadd.f32 %v884, %v904
        %v912 = vadd.f32 %v886, %v904
        %v913 = vadd.f32 %v888, %v904
        %v914 = vadd.f32 %v890, %v904
        %v915 = vadd.f32 %v892, %v904
        %v916 = vadd.f32 %v894, %v904
        %v917 = vadd.f32 %v896, %v904
        %v918 = vadd.f32 %v898, %v904
        %v919 = vadd.f32 %v900, %v904
        %v920 = vadd.f32 %v902, %v904
        %v921 = vxor.u32 %v905, 2147483648
        %v922 = vxor.u32 %v906, 2147483648
        %v923 = vxor.u32 %v907, 2147483648
        %v924 = vxor.u32 %v908, 2147483648
        %v925 = vxor.u32 %v909, 2147483648
        %v926 = vxor.u32 %v910, 2147483648
        %v927 = vxor.u32 %v911, 2147483648
        %v928 = vxor.u32 %v912, 2147483648
        %v929 = vxor.u32 %v913, 2147483648
        %v930 = vxor.u32 %v914, 2147483648
        %v931 = vxor.u32 %v915, 2147483648
        %v932 = vxor.u32 %v916, 2147483648
        %v933 = vxor.u32 %v917, 2147483648
        %v934 = vxor.u32 %v918, 2147483648
        %v935 = vxor.u32 %v919, 2147483648
        %v936 = vxor.u32 %v920, 2147483648
        %v937 = vmul.f32 %v921, 1.442695
        %v938 = vpow.pop %v937
        %v939 = vmul.f32 %v922, 1.442695
        %v940 = vpow.pop %v939
        %v941 = vmul.f32 %v923, 1.442695
        %v942 = vpow.pop %v941
        %v943 = vmul.f32 %v924, 1.442695
        %v944 = vpow.pop %v943
        %v945 = vmul.f32 %v925, 1.442695
        %v946 = vpow.pop %v945
        %v947 = vmul.f32 %v926, 1.442695
        %v948 = vpow.pop %v947
        %v949 = vmul.f32 %v927, 1.442695
        %v950 = vpow.pop %v949
        %v951 = vmul.f32 %v928, 1.442695
        %v952 = vpow.pop %v951
        %v953 = vmul.f32 %v929, 1.442695
        %v954 = vpow.pop %v953
        %v955 = vmul.f32 %v930, 1.442695
        %v956 = vpow.pop %v955
        %v957 = vmul.f32 %v931, 1.442695
        %v958 = vpow.pop %v957
        %v959 = vmul.f32 %v932, 1.442695
        %v960 = vpow.pop %v959
        %v961 = vmul.f32 %v933, 1.442695
        %v962 = vpow.pop %v961
        %v963 = vmul.f32 %v934, 1.442695
        %v964 = vpow.pop %v963
        %v965 = vmul.f32 %v935, 1.442695
        %v966 = vpow.pop %v965
        %v967 = vmul.f32 %v936, 1.442695
        %v968 = vpow.pop %v967
        %v969 = vadd.f32 %v938, 1.0
        %v970 = vadd.f32 %v940, 1.0
        %v971 = vadd.f32 %v942, 1.0
        %v972 = vadd.f32 %v944, 1.0
        %v973 = vadd.f32 %v946, 1.0
        %v974 = vadd.f32 %v948, 1.0
        %v975 = vadd.f32 %v950, 1.0
        %v976 = vadd.f32 %v952, 1.0
        %v977 = vadd.f32 %v954, 1.0
        %v978 = vadd.f32 %v956, 1.0
        %v979 = vadd.f32 %v958, 1.0
        %v980 = vadd.f32 %v960, 1.0
        %v981 = vadd.f32 %v962, 1.0
        %v982 = vadd.f32 %v964, 1.0
        %v983 = vadd.f32 %v966, 1.0
        %v984 = vadd.f32 %v968, 1.0
        %v985 = vrcp.pop %v969
        %v986 = vmul.f32 1.0, %v985
        %v987 = vrcp.pop %v970
        %v988 = vmul.f32 1.0, %v987
        %v989 = vrcp.pop %v971
        %v990 = vmul.f32 1.0, %v989
        %v991 = vrcp.pop %v972
        %v992 = vmul.f32 1.0, %v991
        %v993 = vrcp.pop %v973
        %v994 = vmul.f32 1.0, %v993
        %v995 = vrcp.pop %v974
        %v996 = vmul.f32 1.0, %v995
        %v997 = vrcp.pop %v975
        %v998 = vmul.f32 1.0, %v997
        %v999 = vrcp.pop %v976
        %v1000 = vmul.f32 1.0, %v999
        %v1001 = vrcp.pop %v977
        %v1002 = vmul.f32 1.0, %v1001
        %v1003 = vrcp.pop %v978
        %v1004 = vmul.f32 1.0, %v1003
        %v1005 = vrcp.pop %v979
        %v1006 = vmul.f32 1.0, %v1005
        %v1007 = vrcp.pop %v980
        %v1008 = vmul.f32 1.0, %v1007
        %v1009 = vrcp.pop %v981
        %v1010 = vmul.f32 1.0, %v1009
        %v1011 = vrcp.pop %v982
        %v1012 = vmul.f32 1.0, %v1011
        %v1013 = vrcp.pop %v983
        %v1014 = vmul.f32 1.0, %v1013
        %v1015 = vrcp.pop %v984
        %v1016 = vmul.f32 1.0, %v1015
        %vm1017 = vcmask 7168
        %1018 = vst.msk [vmem:[%s330] sm:$0xff] %vm1017, %v986
        %1019 = vst.msk [vmem:[%s330 + $0x8] sm:$0xff] %vm1017, %v988
        %1020 = vst.msk [vmem:[%s330 + $0x10] sm:$0xff] %vm1017, %v990
        %1021 = vst.msk [vmem:[%s330 + $0x18] sm:$0xff] %vm1017, %v992
        %1022 = vst.msk [vmem:[%s330 + $0x20] sm:$0xff] %vm1017, %v994
        %1023 = vst.msk [vmem:[%s330 + $0x28] sm:$0xff] %vm1017, %v996
        %1024 = vst.msk [vmem:[%s330 + $0x30] sm:$0xff] %vm1017, %v998
        %1025 = vst.msk [vmem:[%s330 + $0x38] sm:$0xff] %vm1017, %v1000
        %1026 = vst.msk [vmem:[%s330 + $0x40] sm:$0xff] %vm1017, %v1002
        %1027 = vst.msk [vmem:[%s330 + $0x48] sm:$0xff] %vm1017, %v1004
        %1028 = vst.msk [vmem:[%s330 + $0x50] sm:$0xff] %vm1017, %v1006
        %1029 = vst.msk [vmem:[%s330 + $0x58] sm:$0xff] %vm1017, %v1008
        %1030 = vst.msk [vmem:[%s330 + $0x60] sm:$0xff] %vm1017, %v1010
        %1031 = vst.msk [vmem:[%s330 + $0x68] sm:$0xff] %vm1017, %v1012
        %1032 = vst.msk [vmem:[%s330 + $0x70] sm:$0xff] %vm1017, %v1014
        %1033 = vst.msk [vmem:[%s330 + $0x78] sm:$0xff] %vm1017, %v1016
        %s1034 = sand.u32 %s183, 1
        %s1035 = sand.u32 %s183, 1
        %s1036 = smul.addr %s1035, 128
        %s1037 = scalar_lea.vmem [#allocation8], %s1036
        // Predicated region
        $region61: #{tpu_custom_call.1} parent=47 // pred_check
          %p1038 = pneg %p193
        $region62: #{tpu_custom_call.1} parent=47 // pred_check_branch
          %1040 = sbr.rel (%p1038) target = $region64
        $region63: #{tpu_custom_call.1} parent=47 // pred_region
          %s1041 = smul.u32 16, %s23
          %s1042 = ssub.s32 25, %s1041
          %p1043 = scmp.lt.s32.totalorder %s1042, 16
          %s1044 = scalar_select %p1043, %s1042, 16
          %s1045 = smul.u32 128, %s1044
          %p1046 = scmp.ne.s32.totalorder 0, %s1045
          %s1047 = smul.addr %s1041, 8
          %s1048 = scalar_lea.vmem %s7, %s1047
          // Predicated region
          $region65: #{tpu_custom_call.1} parent=63 // pred_check
            %p1049 = pneg %p1046
          $region66: #{tpu_custom_call.1} parent=63 // pred_check_branch
            %1051 = sbr.rel (%p1049) target = $region68
          $region67: #{tpu_custom_call.1} parent=63 // pred_region
            // Predicated region
            $region69: #{tpu_custom_call.1} parent=67 // pred_check
              _
            $region70: #{tpu_custom_call.1} parent=67 // pred_check_branch
              %1053 = sbr.rel (0) target = $region72
            $region71: #{tpu_custom_call.1} parent=67 // pred_region
              // Predicated region
              $region91: #{tpu_custom_call.1} parent=71 // pred_check
                _
              $region92: #{tpu_custom_call.1} parent=71 // pred_check_branch
                %1132 = sbr.rel (0) target = $region94
              $region93: #{tpu_custom_call.1} parent=71 // pred_region
                %s1133 = sshrl.u32 %s1044, 4
                // While loop
                $region95: #{tpu_custom_call.1} parent=93 // loop_pre_header
                  _
                $region96: #{tpu_custom_call.1} parent=93 // loop_header
                  %s1135 = sphi 0, %s1137
                  %p1136 = scmp.ge.s32.totalorder %s1135, %s1133
                  %s1140 = sphi 0, %s1177
                  %s1141 = sphi %s1037, %s1180
                  %s1142 = sphi %s1048, %s1181
                $region97: #{tpu_custom_call.1} parent=93 // loop_header_branch
                  %1139 = sbr.rel (%p1136) target = $region101
                $region98: #{tpu_custom_call.1} parent=93 // loop_body
                  %v1143 = vld [vmem:[%s1141] sm:$0xff]
                  %1144 = vst [vmem:[%s1142] sm:$0xff] %v1143
                  %v1145 = vld [vmem:[%s1141 + $0x8] sm:$0xff]
                  %1146 = vst [vmem:[%s1142 + $0x8] sm:$0xff] %v1145
                  %v1147 = vld [vmem:[%s1141 + $0x10] sm:$0xff]
                  %1148 = vst [vmem:[%s1142 + $0x10] sm:$0xff] %v1147
                  %v1149 = vld [vmem:[%s1141 + $0x18] sm:$0xff]
                  %1150 = vst [vmem:[%s1142 + $0x18] sm:$0xff] %v1149
                  %v1151 = vld [vmem:[%s1141 + $0x20] sm:$0xff]
                  %1152 = vst [vmem:[%s1142 + $0x20] sm:$0xff] %v1151
                  %v1153 = vld [vmem:[%s1141 + $0x28] sm:$0xff]
                  %1154 = vst [vmem:[%s1142 + $0x28] sm:$0xff] %v1153
                  %v1155 = vld [vmem:[%s1141 + $0x30] sm:$0xff]
                  %1156 = vst [vmem:[%s1142 + $0x30] sm:$0xff] %v1155
                  %v1157 = vld [vmem:[%s1141 + $0x38] sm:$0xff]
                  %1158 = vst [vmem:[%s1142 + $0x38] sm:$0xff] %v1157
                  %v1159 = vld [vmem:[%s1141 + $0x40] sm:$0xff]
                  %1160 = vst [vmem:[%s1142 + $0x40] sm:$0xff] %v1159
                  %v1161 = vld [vmem:[%s1141 + $0x48] sm:$0xff]
                  %1162 = vst [vmem:[%s1142 + $0x48] sm:$0xff] %v1161
                  %v1163 = vld [vmem:[%s1141 + $0x50] sm:$0xff]
                  %1164 = vst [vmem:[%s1142 + $0x50] sm:$0xff] %v1163
                  %v1165 = vld [vmem:[%s1141 + $0x58] sm:$0xff]
                  %1166 = vst [vmem:[%s1142 + $0x58] sm:$0xff] %v1165
                  %v1167 = vld [vmem:[%s1141 + $0x60] sm:$0xff]
                  %1168 = vst [vmem:[%s1142 + $0x60] sm:$0xff] %v1167
                  %v1169 = vld [vmem:[%s1141 + $0x68] sm:$0xff]
                  %1170 = vst [vmem:[%s1142 + $0x68] sm:$0xff] %v1169
                  %v1171 = vld [vmem:[%s1141 + $0x70] sm:$0xff]
                  %1172 = vst [vmem:[%s1142 + $0x70] sm:$0xff] %v1171
                  %v1173 = vld [vmem:[%s1141 + $0x78] sm:$0xff]
                  %1174 = vst [vmem:[%s1142 + $0x78] sm:$0xff] %v1173
                  %s1175 = sadd.s32 1, %s1140
                  %p1176 = scmp.ge.s32.totalorder %s1175, %s1133
                  %s1177 = scalar_select %p1176, 0, %s1175
                  %s1178 = smul.u32 %s1177, 128
                  %s1179 = smul.u32 %s1177, 128
                  %s1180 = scalar_lea.vmem %s1037, %s1178 [#allocation8]
                  %s1181 = scalar_lea.vmem %s1048, %s1179
                $region99: #{tpu_custom_call.1} parent=93 // loop_footer
                  %s1137 = sadd.s32 %s1135, 1
                $region100: #{tpu_custom_call.1} parent=93 // loop_footer_branch
                  %1134 = sbr.rel target = $region96
                $region101: #{tpu_custom_call.1} parent=93 // loop_exit
                  _
                %s1182 = sshrl.u32 %s1044, 4
                %s1183 = sand.u32 %s1044, 15
                %s1184 = smul.u32 %s1182, 16
                %s1185 = smul.u32 8, %s1184
                %s1186 = scalar_lea.vmem %s1037, %s1185 [#allocation8]
                %s1187 = smul.u32 8, %s1184
                %s1188 = scalar_lea.vmem %s1048, %s1187
                // While loop
                $region102: #{tpu_custom_call.1} parent=93 // loop_pre_header
                  _
                $region103: #{tpu_custom_call.1} parent=93 // loop_header
                  %s1190 = sphi 0, %s1192
                  %p1191 = scmp.ge.s32.totalorder %s1190, %s1183
                  %s1195 = sphi 0, %s1202
                  %s1196 = sphi %s1186, %s1205
                  %s1197 = sphi %s1188, %s1206
                $region104: #{tpu_custom_call.1} parent=93 // loop_header_branch
                  %1194 = sbr.rel (%p1191) target = $region108
                $region105: #{tpu_custom_call.1} parent=93 // loop_body
                  %v1198 = vld [vmem:[%s1196] sm:$0xff]
                  %1199 = vst [vmem:[%s1197] sm:$0xff] %v1198
                  %s1200 = sadd.s32 1, %s1195
                  %p1201 = scmp.ge.s32.totalorder %s1200, %s1183
                  %s1202 = scalar_select %p1201, 0, %s1200
                  %s1203 = smul.u32 %s1202, 8
                  %s1204 = smul.u32 %s1202, 8
                  %s1205 = scalar_lea.vmem %s1186, %s1203 [#allocation8]
                  %s1206 = scalar_lea.vmem %s1188, %s1204
                $region106: #{tpu_custom_call.1} parent=93 // loop_footer
                  %s1192 = sadd.s32 %s1190, 1
                $region107: #{tpu_custom_call.1} parent=93 // loop_footer_branch
                  %1189 = sbr.rel target = $region103
                $region108: #{tpu_custom_call.1} parent=93 // loop_exit
                  _
              $region94: #{tpu_custom_call.1} parent=71 // pred_fallthru
                _
              // Predicated region
              $region109: #{tpu_custom_call.1} parent=71 // pred_check
                _
              $region110: #{tpu_custom_call.1} parent=71 // pred_check_branch
                %1208 = sbr.rel target = $region112
              $region111: #{tpu_custom_call.1} parent=71 // pred_region
                _
              $region112: #{tpu_custom_call.1} parent=71 // pred_fallthru
                _
            $region72: #{tpu_custom_call.1} parent=67 // pred_fallthru
              _
            // Predicated region
            $region73: #{tpu_custom_call.1} parent=67 // pred_check
              _
            $region74: #{tpu_custom_call.1} parent=67 // pred_check_branch
              %1055 = sbr.rel target = $region76
            $region75: #{tpu_custom_call.1} parent=67 // pred_region
              %s1057 = sshrl.u32 %s1044, 4
              // While loop
              $region77: #{tpu_custom_call.1} parent=75 // loop_pre_header
                _
              $region78: #{tpu_custom_call.1} parent=75 // loop_header
                %s1059 = sphi 0, %s1061
                %p1060 = scmp.ge.s32.totalorder %s1059, %s1057
                %s1064 = sphi 0, %s1101
                %s1065 = sphi %s1037, %s1104
                %s1066 = sphi %s1048, %s1105
              $region79: #{tpu_custom_call.1} parent=75 // loop_header_branch
                %1063 = sbr.rel (%p1060) target = $region83
              $region80: #{tpu_custom_call.1} parent=75 // loop_body
                %v1067 = vld [vmem:[%s1065] sm:$0xff]
                %1068 = vst [vmem:[%s1066] sm:$0xff] %v1067
                %v1069 = vld [vmem:[%s1065 + $0x8] sm:$0xff]
                %1070 = vst [vmem:[%s1066 + $0x8] sm:$0xff] %v1069
                %v1071 = vld [vmem:[%s1065 + $0x10] sm:$0xff]
                %1072 = vst [vmem:[%s1066 + $0x10] sm:$0xff] %v1071
                %v1073 = vld [vmem:[%s1065 + $0x18] sm:$0xff]
                %1074 = vst [vmem:[%s1066 + $0x18] sm:$0xff] %v1073
                %v1075 = vld [vmem:[%s1065 + $0x20] sm:$0xff]
                %1076 = vst [vmem:[%s1066 + $0x20] sm:$0xff] %v1075
                %v1077 = vld [vmem:[%s1065 + $0x28] sm:$0xff]
                %1078 = vst [vmem:[%s1066 + $0x28] sm:$0xff] %v1077
                %v1079 = vld [vmem:[%s1065 + $0x30] sm:$0xff]
                %1080 = vst [vmem:[%s1066 + $0x30] sm:$0xff] %v1079
                %v1081 = vld [vmem:[%s1065 + $0x38] sm:$0xff]
                %1082 = vst [vmem:[%s1066 + $0x38] sm:$0xff] %v1081
                %v1083 = vld [vmem:[%s1065 + $0x40] sm:$0xff]
                %1084 = vst [vmem:[%s1066 + $0x40] sm:$0xff] %v1083
                %v1085 = vld [vmem:[%s1065 + $0x48] sm:$0xff]
                %1086 = vst [vmem:[%s1066 + $0x48] sm:$0xff] %v1085
                %v1087 = vld [vmem:[%s1065 + $0x50] sm:$0xff]
                %1088 = vst [vmem:[%s1066 + $0x50] sm:$0xff] %v1087
                %v1089 = vld [vmem:[%s1065 + $0x58] sm:$0xff]
                %1090 = vst [vmem:[%s1066 + $0x58] sm:$0xff] %v1089
                %v1091 = vld [vmem:[%s1065 + $0x60] sm:$0xff]
                %1092 = vst [vmem:[%s1066 + $0x60] sm:$0xff] %v1091
                %v1093 = vld [vmem:[%s1065 + $0x68] sm:$0xff]
                %1094 = vst [vmem:[%s1066 + $0x68] sm:$0xff] %v1093
                %v1095 = vld [vmem:[%s1065 + $0x70] sm:$0xff]
                %1096 = vst [vmem:[%s1066 + $0x70] sm:$0xff] %v1095
                %v1097 = vld [vmem:[%s1065 + $0x78] sm:$0xff]
                %1098 = vst [vmem:[%s1066 + $0x78] sm:$0xff] %v1097
                %s1099 = sadd.s32 1, %s1064
                %p1100 = scmp.ge.s32.totalorder %s1099, %s1057
                %s1101 = scalar_select %p1100, 0, %s1099
                %s1102 = smul.u32 %s1101, 128
                %s1103 = smul.u32 %s1101, 128
                %s1104 = scalar_lea.vmem %s1037, %s1102 [#allocation8]
                %s1105 = scalar_lea.vmem %s1048, %s1103
              $region81: #{tpu_custom_call.1} parent=75 // loop_footer
                %s1061 = sadd.s32 %s1059, 1
              $region82: #{tpu_custom_call.1} parent=75 // loop_footer_branch
                %1058 = sbr.rel target = $region78
              $region83: #{tpu_custom_call.1} parent=75 // loop_exit
                _
              %s1106 = sshrl.u32 %s1044, 4
              %s1107 = sand.u32 %s1044, 15
              %s1108 = smul.u32 %s1106, 16
              %s1109 = smul.u32 8, %s1108
              %s1110 = scalar_lea.vmem %s1037, %s1109 [#allocation8]
              %s1111 = smul.u32 8, %s1108
              %s1112 = scalar_lea.vmem %s1048, %s1111
              // While loop
              $region84: #{tpu_custom_call.1} parent=75 // loop_pre_header
                _
              $region85: #{tpu_custom_call.1} parent=75 // loop_header
                %s1114 = sphi 0, %s1116
                %p1115 = scmp.ge.s32.totalorder %s1114, %s1107
                %s1119 = sphi 0, %s1126
                %s1120 = sphi %s1110, %s1129
                %s1121 = sphi %s1112, %s1130
              $region86: #{tpu_custom_call.1} parent=75 // loop_header_branch
                %1118 = sbr.rel (%p1115) target = $region90
              $region87: #{tpu_custom_call.1} parent=75 // loop_body
                %v1122 = vld [vmem:[%s1120] sm:$0xff]
                %1123 = vst [vmem:[%s1121] sm:$0xff] %v1122
                %s1124 = sadd.s32 1, %s1119
                %p1125 = scmp.ge.s32.totalorder %s1124, %s1107
                %s1126 = scalar_select %p1125, 0, %s1124
                %s1127 = smul.u32 %s1126, 8
                %s1128 = smul.u32 %s1126, 8
                %s1129 = scalar_lea.vmem %s1110, %s1127 [#allocation8]
                %s1130 = scalar_lea.vmem %s1112, %s1128
              $region88: #{tpu_custom_call.1} parent=75 // loop_footer
                %s1116 = sadd.s32 %s1114, 1
              $region89: #{tpu_custom_call.1} parent=75 // loop_footer_branch
                %1113 = sbr.rel target = $region85
              $region90: #{tpu_custom_call.1} parent=75 // loop_exit
                _
            $region76: #{tpu_custom_call.1} parent=67 // pred_fallthru
              _
          $region68: #{tpu_custom_call.1} parent=63 // pred_fallthru
            _
          %1209 = vnop
        $region64: #{tpu_custom_call.1} parent=47 // pred_fallthru
          _
      $region48: #{tpu_custom_call.1} parent=5 // pred_fallthru
        _
      %p1210 = scmp.le.s32.totalorder 2, %s18
      // Predicated region
      $region113: #{tpu_custom_call.1} parent=5 // pred_check
        %p1211 = pneg %p1210
      $region114: #{tpu_custom_call.1} parent=5 // pred_check_branch
        %1213 = sbr.rel (%p1211) target = $region116
      $region115: #{tpu_custom_call.1} parent=5 // pred_region
        %s1214 = ssub.s32 %s18, 2
        // Predicated region
        $region117: #{tpu_custom_call.1} parent=115 // pred_check
          %p1215 = pneg %p199
        $region118: #{tpu_custom_call.1} parent=115 // pred_check_branch
          %1217 = sbr.rel (%p1215) target = $region120
        $region119: #{tpu_custom_call.1} parent=115 // pred_region
          %s1218 = sand.u32 %s184, 1
          %s1219 = sand.u32 %s184, 1
          %s1220 = smul.addr %s1219, 128
          %s1221 = scalar_lea.vmem [#allocation8], %s1220
        $region120: #{tpu_custom_call.1} parent=115 // pred_fallthru
          _
      $region116: #{tpu_custom_call.1} parent=5 // pred_fallthru
        _
    $region6: #{tpu_custom_call.1} parent=1 // loop_footer
      %s22 = sadd.s32 1, %s18
    $region7: #{tpu_custom_call.1} parent=1 // loop_footer_branch
      %17 = sbr.rel target = $region3
    $region8: #{tpu_custom_call.1} parent=1 // loop_exit
      _
    %1222 = vsyncpa [#allocation4], 1
    %s1223 = scalar_lea.sflag [#allocation4], 1
    %1224 = vsyncpa %s1223, 1
    %1225 = vsyncpa [#allocation6], 1

</llo_original>
